<compile_context>
chip_gen: v7x
topology: tpu7x:2x2x1
jax: 0.10.0
libtpu: 0.0.40
codegen_flags: <defaults>
</compile_context>

<pallas_src>
import functools

import jax
import jax.numpy as jnp
from jax.experimental import pallas as pl
from jax.experimental.pallas import tpu as pltpu


def _round_up(x, m):
    return (x + m - 1) // m * m


def _make_dice_kernel(num, tf, feat, k_per_core, needs_mask):
    n_fold = tf // 128

    def kernel(m1_ref, m2_ref, o_ref):
        c = pl.program_id(0)   # TensorCore split of the feature range
        k = pl.program_id(1)   # reduction over feature chunks

        @pl.when(k == 0)
        def _():
            o_ref[...] = jnp.zeros_like(o_ref)

        m1 = m1_ref[...]
        m2 = m2_ref[...]

        if needs_mask:
            # Zero out lanes past the true feature extent (ragged boundary block
            # and clamped/duplicated tail chunks). where() selects, so unspecified
            # padding values (possibly NaN garbage) never propagate.
            start = (c * k_per_core + k) * tf
            lane = jax.lax.broadcasted_iota(jnp.int32, (num, tf), 1)
            valid = (lane + start) < feat
            m1 = jnp.where(valid, m1, jnp.zeros_like(m1))
            m2 = jnp.where(valid, m2, jnp.zeros_like(m2))

        m1 = m1.astype(jnp.float32)
        m2 = m2.astype(jnp.float32)

        # Fold (num, tf) -> (num, 128) with lane-aligned slices + VPU adds only;
        # the single cross-lane reduce happens once, outside the kernel.
        pi = m1[:, 0:128] * m2[:, 0:128]           # intersection partial
        ps = m1[:, 0:128] + m2[:, 0:128]           # sum(m1) + sum(m2) partial
        for j in range(1, n_fold):
            lo = j * 128
            hi = lo + 128
            pi = pi + m1[:, lo:hi] * m2[:, lo:hi]
            ps = ps + m1[:, lo:hi] + m2[:, lo:hi]

        o_ref[0, :, :] = o_ref[0, :, :] + pi
        o_ref[1, :, :] = o_ref[1, :, :] + ps

    return kernel


@functools.partial(jax.jit, static_argnames=("max_lane_tile",))
def dice_loss(pred, target, *, max_lane_tile=8192):
    """Pallas implementation of DiceLoss.forward (smooth = 0, like the reference)."""
    assert pred.shape == target.shape
    num = pred.shape[0]

    # Flatten per sample; same per-sample membership as torch.view(num, -1).
    # Inputs keep their dtype (bf16 streams half the HBM bytes; f32 accum in-kernel).
    m1 = pred.reshape(num, -1)
    m2 = target.reshape(num, -1)
    feat = m1.shape[1]

    # ---- choose the feature (lane) tile ------------------------------------
    f128 = _round_up(feat, 128)
    sub = _round_up(num, 8)                      # physical sublane footprint
    # 2 inputs x 2 pipeline buffers of (sub, tf) f32 must fit a conservative
    # budget that keeps double-buffering alive on v5e/v6e/v7x.
    vmem_budget = 12 * 1024 * 1024
    tf_cap = max(128, (vmem_budget // (2 * 2 * sub * 4)) // 128 * 128)
    tile_req = max(128, (max_lane_tile // 128) * 128)
    tf = min(tile_req, f128, tf_cap)

    k_total = pl.cdiv(feat, tf)
    # Split the reduction across 2 TensorCores (wins on v7x; harmless on 1-TC chips).
    ncores = 2 if k_total >= 2 else 1
    k_per_core = pl.cdiv(k_total, ncores)
    clamp = ncores * k_per_core > k_total
    needs_mask = ncores * k_per_core * tf != feat

    def in_index(c, k):
        q = c * k_per_core + k
        if clamp:
            q = jnp.minimum(q, k_total - 1)      # keep duplicated tail chunks in bounds
        return (0, q)

    kernel = _make_dice_kernel(num, tf, feat, k_per_core, needs_mask)

    parts = pl.pallas_call(
        kernel,
        out_shape=jax.ShapeDtypeStruct((ncores, 2, num, 128), jnp.float32),
        grid_spec=pltpu.PrefetchScalarGridSpec(
            num_scalar_prefetch=0,
            grid=(ncores, k_per_core),
            in_specs=[
                pl.BlockSpec((num, tf), in_index),
                pl.BlockSpec((num, tf), in_index),
            ],
            out_specs=pl.BlockSpec((None, 2, num, 128), lambda c, k: (c, 0, 0, 0)),
        ),
        compiler_params=pltpu.CompilerParams(
            dimension_semantics=("parallel", "arbitrary"),
            vmem_limit_bytes=32 * 1024 * 1024,
        ),
    )(m1, m2)

    # Tiny epilogue on the (ncores, 2, num, 128) partials (a few KB).
    inter = jnp.sum(parts[:, 0], axis=(0, 2))    # per-sample sum(m1 * m2)
    tot = jnp.sum(parts[:, 1], axis=(0, 2))      # per-sample sum(m1) + sum(m2)
    # smooth = 0, exactly as in the reference module.
    return 1.0 - jnp.sum(2.0 * inter / tot) / num


def _reference_dice_loss(pred, target):
    num = pred.shape[0]
    m1 = pred.reshape(num, -1).astype(jnp.float32)
    m2 = target.reshape(num, -1).astype(jnp.float32)
    inter = jnp.sum(m1 * m2, axis=1)
    return 1.0 - jnp.sum(2.0 * inter / (jnp.sum(m1, axis=1) + jnp.sum(m2, axis=1))) / num


if __name__ == "__main__":
    key = jax.random.PRNGKey(0)

    def _make(shape, k):
        k1, k2 = jax.random.split(k)
        pred = jax.nn.sigmoid(jax.random.normal(k1, shape, dtype=jnp.float32))
        target = (jax.random.uniform(k2, shape) > 0.5).astype(jnp.float32)
        return pred, target

    # 1) main case: NCHW (2, 4, 16, 16) -> F = 1024, single chunk.
    key, sub = jax.random.split(key)
    p, t = _make((2, 4, 16, 16), sub)
    loss = dice_loss(p, t)
    jax.block_until_ready(loss)
    ref = _reference_dice_loss(p, t)
    assert jnp.allclose(loss, ref, atol=1e-5, rtol=1e-5), (loss, ref)

    # 2) ragged feature count (F = 300, not a multiple of 128) -> in-kernel tail mask.
    key, sub = jax.random.split(key)
    p, t = _make((2, 3, 10, 10), sub)
    loss = dice_loss(p, t)
    ref = _reference_dice_loss(p, t)
    assert jnp.allclose(loss, ref, atol=1e-5, rtol=1e-5), (loss, ref)

    # 3) many chunks -> 2-way "parallel" split of the reduction + clamped tail chunk.
    key, sub = jax.random.split(key)
    p, t = _make((2, 3, 8, 16), sub)             # F = 384 = 3 chunks of 128
    loss = dice_loss(p, t, max_lane_tile=128)
    ref = _reference_dice_loss(p, t)
    assert jnp.allclose(loss, ref, atol=1e-5, rtol=1e-5), (loss, ref)

    # 4) bf16 activations stream half the HBM bytes; accumulation stays f32.
    key, sub = jax.random.split(key)
    p, t = _make((2, 4, 16, 16), sub)
    loss = dice_loss(p.astype(jnp.bfloat16), t.astype(jnp.bfloat16))
    ref = _reference_dice_loss(p.astype(jnp.bfloat16), t.astype(jnp.bfloat16))
    assert jnp.allclose(loss, ref, atol=1e-3, rtol=1e-3), (loss, ref)

    jax.block_until_ready(loss)
    print("KERNEL_OK")
</pallas_src>

<mosaic_0001>
module attributes {stable_mosaic.version = 11 : i64} {
  func.func @kernel(%arg0: i32, %arg1: i32, %arg2: memref<2x1024xf32, #tpu.memory_space<vmem>>, %arg3: memref<2x1024xf32, #tpu.memory_space<vmem>>, %arg4: memref<1x2x2x128xf32, #tpu.memory_space<vmem>>) attributes {dimension_semantics = [#tpu.dimension_semantics<parallel>, #tpu.dimension_semantics<arbitrary>], iteration_bounds = array<i64: 1, 1>, scalar_prefetch = 0 : i64, scratch_operands = 0 : i64, tpu.core_type = #tpu.core_type<tc>, window_params = [{transform_indices = @transform_0, window_bounds = array<i64: 2, 1024>}, {transform_indices = @transform_1, window_bounds = array<i64: 2, 1024>}, {transform_indices = @transform_2, window_bounds = array<i64: 1, 2, 2, 128>}]} {
    %c0_i32 = arith.constant 0 : i32
    %0 = arith.cmpi eq, %arg1, %c0_i32 : i32
    %1 = arith.extui %0 : i1 to i32
    %c0_i32_0 = arith.constant 0 : i32
    %2 = arith.cmpi ne, %1, %c0_i32_0 : i32
    scf.if %2 {
      %cst = arith.constant 0.000000e+00 : f32
      %79 = vector.broadcast %cst : f32 to vector<2x2x128xf32>
      %c0_19 = arith.constant 0 : index
      %c0_20 = arith.constant 0 : index
      %c0_21 = arith.constant 0 : index
      %c0_22 = arith.constant 0 : index
      %80 = vector.load %arg4[%c0_19, %c0_20, %c0_21, %c0_22] : memref<1x2x2x128xf32, #tpu.memory_space<vmem>>, vector<1x2x2x128xf32>
      %81 = vector.shape_cast %80 : vector<1x2x2x128xf32> to vector<2x2x128xf32>
      %82 = vector.shape_cast %79 : vector<2x2x128xf32> to vector<1x2x2x128xf32>
      tpu.vector_store %arg4[%c0_19, %c0_20, %c0_21, %c0_22], %82 {strides = array<i32>} : memref<1x2x2x128xf32, #tpu.memory_space<vmem>>, vector<1x2x2x128xf32>,
    } else {
    }
    %c0 = arith.constant 0 : index
    %c0_1 = arith.constant 0 : index
    %3 = vector.load %arg2[%c0, %c0_1] : memref<2x1024xf32, #tpu.memory_space<vmem>>, vector<2x1024xf32>
    %c0_2 = arith.constant 0 : index
    %c0_3 = arith.constant 0 : index
    %4 = vector.load %arg3[%c0_2, %c0_3] : memref<2x1024xf32, #tpu.memory_space<vmem>>, vector<2x1024xf32>
    %5 = vector.extract_strided_slice %3 {offsets = [0, 0], sizes = [2, 128], strides = [1, 1]} : vector<2x1024xf32> to vector<2x128xf32>
    %6 = vector.extract_strided_slice %4 {offsets = [0, 0], sizes = [2, 128], strides = [1, 1]} : vector<2x1024xf32> to vector<2x128xf32>
    %7 = arith.mulf %5, %6 : vector<2x128xf32>
    %8 = vector.extract_strided_slice %3 {offsets = [0, 0], sizes = [2, 128], strides = [1, 1]} : vector<2x1024xf32> to vector<2x128xf32>
    %9 = vector.extract_strided_slice %4 {offsets = [0, 0], sizes = [2, 128], strides = [1, 1]} : vector<2x1024xf32> to vector<2x128xf32>
    %10 = arith.addf %8, %9 : vector<2x128xf32>
    %11 = vector.extract_strided_slice %3 {offsets = [0, 128], sizes = [2, 128], strides = [1, 1]} : vector<2x1024xf32> to vector<2x128xf32>
    %12 = vector.extract_strided_slice %4 {offsets = [0, 128], sizes = [2, 128], strides = [1, 1]} : vector<2x1024xf32> to vector<2x128xf32>
    %13 = arith.mulf %11, %12 : vector<2x128xf32>
    %14 = arith.addf %7, %13 : vector<2x128xf32>
    %15 = vector.extract_strided_slice %3 {offsets = [0, 128], sizes = [2, 128], strides = [1, 1]} : vector<2x1024xf32> to vector<2x128xf32>
    %16 = arith.addf %10, %15 : vector<2x128xf32>
    %17 = vector.extract_strided_slice %4 {offsets = [0, 128], sizes = [2, 128], strides = [1, 1]} : vector<2x1024xf32> to vector<2x128xf32>
    %18 = arith.addf %16, %17 : vector<2x128xf32>
    %19 = vector.extract_strided_slice %3 {offsets = [0, 256], sizes = [2, 128], strides = [1, 1]} : vector<2x1024xf32> to vector<2x128xf32>
    %20 = vector.extract_strided_slice %4 {offsets = [0, 256], sizes = [2, 128], strides = [1, 1]} : vector<2x1024xf32> to vector<2x128xf32>
    %21 = arith.mulf %19, %20 : vector<2x128xf32>
    %22 = arith.addf %14, %21 : vector<2x128xf32>
    %23 = vector.extract_strided_slice %3 {offsets = [0, 256], sizes = [2, 128], strides = [1, 1]} : vector<2x1024xf32> to vector<2x128xf32>
    %24 = arith.addf %18, %23 : vector<2x128xf32>
    %25 = vector.extract_strided_slice %4 {offsets = [0, 256], sizes = [2, 128], strides = [1, 1]} : vector<2x1024xf32> to vector<2x128xf32>
    %26 = arith.addf %24, %25 : vector<2x128xf32>
    %27 = vector.extract_strided_slice %3 {offsets = [0, 384], sizes = [2, 128], strides = [1, 1]} : vector<2x1024xf32> to vector<2x128xf32>
    %28 = vector.extract_strided_slice %4 {offsets = [0, 384], sizes = [2, 128], strides = [1, 1]} : vector<2x1024xf32> to vector<2x128xf32>
    %29 = arith.mulf %27, %28 : vector<2x128xf32>
    %30 = arith.addf %22, %29 : vector<2x128xf32>
    %31 = vector.extract_strided_slice %3 {offsets = [0, 384], sizes = [2, 128], strides = [1, 1]} : vector<2x1024xf32> to vector<2x128xf32>
    %32 = arith.addf %26, %31 : vector<2x128xf32>
    %33 = vector.extract_strided_slice %4 {offsets = [0, 384], sizes = [2, 128], strides = [1, 1]} : vector<2x1024xf32> to vector<2x128xf32>
    %34 = arith.addf %32, %33 : vector<2x128xf32>
    %35 = vector.extract_strided_slice %3 {offsets = [0, 512], sizes = [2, 128], strides = [1, 1]} : vector<2x1024xf32> to vector<2x128xf32>
    %36 = vector.extract_strided_slice %4 {offsets = [0, 512], sizes = [2, 128], strides = [1, 1]} : vector<2x1024xf32> to vector<2x128xf32>
    %37 = arith.mulf %35, %36 : vector<2x128xf32>
    %38 = arith.addf %30, %37 : vector<2x128xf32>
    %39 = vector.extract_strided_slice %3 {offsets = [0, 512], sizes = [2, 128], strides = [1, 1]} : vector<2x1024xf32> to vector<2x128xf32>
    %40 = arith.addf %34, %39 : vector<2x128xf32>
    %41 = vector.extract_strided_slice %4 {offsets = [0, 512], sizes = [2, 128], strides = [1, 1]} : vector<2x1024xf32> to vector<2x128xf32>
    %42 = arith.addf %40, %41 : vector<2x128xf32>
    %43 = vector.extract_strided_slice %3 {offsets = [0, 640], sizes = [2, 128], strides = [1, 1]} : vector<2x1024xf32> to vector<2x128xf32>
    %44 = vector.extract_strided_slice %4 {offsets = [0, 640], sizes = [2, 128], strides = [1, 1]} : vector<2x1024xf32> to vector<2x128xf32>
    %45 = arith.mulf %43, %44 : vector<2x128xf32>
    %46 = arith.addf %38, %45 : vector<2x128xf32>
    %47 = vector.extract_strided_slice %3 {offsets = [0, 640], sizes = [2, 128], strides = [1, 1]} : vector<2x1024xf32> to vector<2x128xf32>
    %48 = arith.addf %42, %47 : vector<2x128xf32>
    %49 = vector.extract_strided_slice %4 {offsets = [0, 640], sizes = [2, 128], strides = [1, 1]} : vector<2x1024xf32> to vector<2x128xf32>
    %50 = arith.addf %48, %49 : vector<2x128xf32>
    %51 = vector.extract_strided_slice %3 {offsets = [0, 768], sizes = [2, 128], strides = [1, 1]} : vector<2x1024xf32> to vector<2x128xf32>
    %52 = vector.extract_strided_slice %4 {offsets = [0, 768], sizes = [2, 128], strides = [1, 1]} : vector<2x1024xf32> to vector<2x128xf32>
    %53 = arith.mulf %51, %52 : vector<2x128xf32>
    %54 = arith.addf %46, %53 : vector<2x128xf32>
    %55 = vector.extract_strided_slice %3 {offsets = [0, 768], sizes = [2, 128], strides = [1, 1]} : vector<2x1024xf32> to vector<2x128xf32>
    %56 = arith.addf %50, %55 : vector<2x128xf32>
    %57 = vector.extract_strided_slice %4 {offsets = [0, 768], sizes = [2, 128], strides = [1, 1]} : vector<2x1024xf32> to vector<2x128xf32>
    %58 = arith.addf %56, %57 : vector<2x128xf32>
    %59 = vector.extract_strided_slice %3 {offsets = [0, 896], sizes = [2, 128], strides = [1, 1]} : vector<2x1024xf32> to vector<2x128xf32>
    %60 = vector.extract_strided_slice %4 {offsets = [0, 896], sizes = [2, 128], strides = [1, 1]} : vector<2x1024xf32> to vector<2x128xf32>
    %61 = arith.mulf %59, %60 : vector<2x128xf32>
    %62 = arith.addf %54, %61 : vector<2x128xf32>
    %63 = vector.extract_strided_slice %3 {offsets = [0, 896], sizes = [2, 128], strides = [1, 1]} : vector<2x1024xf32> to vector<2x128xf32>
    %64 = arith.addf %58, %63 : vector<2x128xf32>
    %65 = vector.extract_strided_slice %4 {offsets = [0, 896], sizes = [2, 128], strides = [1, 1]} : vector<2x1024xf32> to vector<2x128xf32>
    %66 = arith.addf %64, %65 : vector<2x128xf32>
    %c0_4 = arith.constant 0 : index
    %c0_5 = arith.constant 0 : index
    %c0_6 = arith.constant 0 : index
    %c0_7 = arith.constant 0 : index
    %67 = vector.load %arg4[%c0_4, %c0_5, %c0_6, %c0_7] : memref<1x2x2x128xf32, #tpu.memory_space<vmem>>, vector<1x1x2x128xf32>
    %68 = vector.shape_cast %67 : vector<1x1x2x128xf32> to vector<2x128xf32>
    %69 = arith.addf %68, %62 : vector<2x128xf32>
    %c0_8 = arith.constant 0 : index
    %c0_9 = arith.constant 0 : index
    %c0_10 = arith.constant 0 : index
    %c0_11 = arith.constant 0 : index
    %70 = vector.load %arg4[%c0_8, %c0_9, %c0_10, %c0_11] : memref<1x2x2x128xf32, #tpu.memory_space<vmem>>, vector<1x1x2x128xf32>
    %71 = vector.shape_cast %70 : vector<1x1x2x128xf32> to vector<2x128xf32>
    %72 = vector.shape_cast %69 : vector<2x128xf32> to vector<1x1x2x128xf32>
    tpu.vector_store %arg4[%c0_8, %c0_9, %c0_10, %c0_11], %72 {strides = array<i32>} : memref<1x2x2x128xf32, #tpu.memory_space<vmem>>, vector<1x1x2x128xf32>,
    %c0_12 = arith.constant 0 : index
    %c1 = arith.constant 1 : index
    %c0_13 = arith.constant 0 : index
    %c0_14 = arith.constant 0 : index
    %73 = vector.load %arg4[%c0_12, %c1, %c0_13, %c0_14] : memref<1x2x2x128xf32, #tpu.memory_space<vmem>>, vector<1x1x2x128xf32>
    %74 = vector.shape_cast %73 : vector<1x1x2x128xf32> to vector<2x128xf32>
    %75 = arith.addf %74, %66 : vector<2x128xf32>
    %c0_15 = arith.constant 0 : index
    %c1_16 = arith.constant 1 : index
    %c0_17 = arith.constant 0 : index
    %c0_18 = arith.constant 0 : index
    %76 = vector.load %arg4[%c0_15, %c1_16, %c0_17, %c0_18] : memref<1x2x2x128xf32, #tpu.memory_space<vmem>>, vector<1x1x2x128xf32>
    %77 = vector.shape_cast %76 : vector<1x1x2x128xf32> to vector<2x128xf32>
    %78 = vector.shape_cast %75 : vector<2x128xf32> to vector<1x1x2x128xf32>
    tpu.vector_store %arg4[%c0_15, %c1_16, %c0_17, %c0_18], %78 {strides = array<i32>} : memref<1x2x2x128xf32, #tpu.memory_space<vmem>>, vector<1x1x2x128xf32>,
    return
  }
  func.func @transform_0(%arg0: i32, %arg1: i32) -> (i32, i32) {
    %c1_i32 = arith.constant 1 : i32
    %0 = arith.muli %arg0, %c1_i32 : i32
    %1 = arith.addi %0, %arg1 : i32
    %c0_i32 = arith.constant 0 : i32
    %c0_i32_0 = arith.constant 0 : i32
    return %c0_i32, %1 : i32, i32
  }
  func.func @transform_1(%arg0: i32, %arg1: i32) -> (i32, i32) {
    %c1_i32 = arith.constant 1 : i32
    %0 = arith.muli %arg0, %c1_i32 : i32
    %1 = arith.addi %0, %arg1 : i32
    %c0_i32 = arith.constant 0 : i32
    %c0_i32_0 = arith.constant 0 : i32
    return %c0_i32, %1 : i32, i32
  }
  func.func @transform_2(%arg0: i32, %arg1: i32) -> (i32, i32, i32, i32) {
    %c0_i32 = arith.constant 0 : i32
    %c0_i32_0 = arith.constant 0 : i32
    %c0_i32_1 = arith.constant 0 : i32
    %c0_i32_2 = arith.constant 0 : i32
    return %arg0, %c0_i32, %c0_i32_0, %c0_i32_1 : i32, i32, i32, i32
  }
}

</mosaic_0001>

<llo_original>
// kernel: dice_loss.1
$region0: #{dice_loss.1}
  #allocation0 [shape = 'u32[]', space=smem, size = 0x4, offset = 0x4, fixed_abs, tag = 'smem constant byte address 0x4 - core index']
  #allocation1 [shape = 'u32[144,128]{1,0:T(1,128)}', space=vmem, size = 0x12000, scoped, tag = 'internal scratch']
  %s0 = inlined_call_operand.vmem [shape: f32[2,1024], index: 0, kind: input, shape index: {}]
  %s1 = inlined_call_operand.vmem [shape: f32[2,1024], index: 1, kind: input, shape index: {}]
  %s2 = inlined_call_operand.vmem [shape: f32[1,2,2,128], index: 2, kind: output, shape index: {}]
  %s3 = sld [smem:[#allocation0]]
  $region22: #{dice_loss.1} parent=0
    _
  %s5 = ssub.s32 1, %s3
  %s6 = scalar_select 0, %s5, %s3
  // Predicated region
  $region2: #{dice_loss.1} parent=0 // pred_check
    _
  $region3: #{dice_loss.1} parent=0 // pred_check_branch
    %8 = sbr.rel (0) target = $region5
  $region4: #{dice_loss.1} parent=0 // pred_region
    %s9 = sadd.s32 0, 0
    %s10 = smul.u32 8, %s9
    %p11 = scmp.lt.s32.totalorder %s10, 7
    %s12 = scalar_select %p11, %s10, 7
    %s13 = smul.addr %s12, 2
    %s14 = scalar_lea.vmem %s0, %s13
    %s15 = sadd.s32 0, 0
    %s16 = smul.u32 8, %s15
  $region5: #{dice_loss.1} parent=0 // pred_fallthru
    _
  // Predicated region
  $region6: #{dice_loss.1} parent=0 // pred_check
    _
  $region7: #{dice_loss.1} parent=0 // pred_check_branch
    %18 = sbr.rel (0) target = $region9
  $region8: #{dice_loss.1} parent=0 // pred_region
    %s19 = sadd.s32 0, 0
    %s20 = smul.u32 8, %s19
    %p21 = scmp.lt.s32.totalorder %s20, 7
    %s22 = scalar_select %p21, %s20, 7
    %s23 = smul.addr %s22, 2
    %s24 = scalar_lea.vmem %s1, %s23
    %s25 = sadd.s32 0, 0
    %s26 = smul.u32 8, %s25
  $region9: #{dice_loss.1} parent=0 // pred_fallthru
    _
  %s27 = sadd.s32 0, 0
  %s28 = smul.u32 8, %s27
  %p29 = scmp.lt.s32.totalorder %s28, 7
  %s30 = scalar_select %p29, %s28, 7
  %s31 = smul.addr %s30, 2
  %s32 = scalar_lea.vmem %s0, %s31
  %s33 = sadd.s32 0, 0
  %s34 = smul.u32 8, %s33
  %p35 = scmp.lt.s32.totalorder %s34, 7
  %s36 = scalar_select %p35, %s34, 7
  %s37 = smul.addr %s36, 2
  %s38 = scalar_lea.vmem %s1, %s37
  %s39 = sadd.s32 0, 0
  %s40 = smul.u32 8, %s39
  %p41 = scmp.lt.s32.totalorder %s40, 7
  %s42 = scalar_select %p41, %s40, 7
  %s43 = smul.addr %s42, 2
  %s44 = scalar_lea.vmem %s0, %s43
  %s45 = sadd.s32 0, 0
  %s46 = smul.u32 8, %s45
  %s47 = sadd.s32 0, 0
  %s48 = smul.u32 8, %s47
  %p49 = scmp.lt.s32.totalorder %s48, 7
  %s50 = scalar_select %p49, %s48, 7
  %s51 = smul.addr %s50, 2
  %s52 = scalar_lea.vmem %s1, %s51
  %s53 = sadd.s32 0, 0
  %s54 = smul.u32 8, %s53
  %p55 = scmp.eq.s32.totalorder 0, 0
  // Predicated region
  $region10: #{dice_loss.1} parent=0 // pred_check
    %p56 = pneg %p55
  $region11: #{dice_loss.1} parent=0 // pred_check_branch
    %58 = sbr.rel (%p56) target = $region13
  $region12: #{dice_loss.1} parent=0 // pred_region
    %59 = vst [vmem:[%s2] sm:$0x3] 0.0
    %60 = vst [vmem:[%s2 + $0x2] sm:$0x3] 0.0
  $region13: #{dice_loss.1} parent=0 // pred_fallthru
    _
  %v61 = vld [vmem:[%s44] sm:$0xff]
  %v62 = vld [vmem:[%s44 + $0x8] sm:$0xff]
  %v63 = vld [vmem:[%s52] sm:$0xff]
  %v64 = vld [vmem:[%s52 + $0x8] sm:$0xff]
  %v65 = vmul.f32 %v61, %v63
  %v66 = vadd.f32 %v61, %v63
  %v68 = vrot.slane %v61, 2
  %v71 = vrot.slane %v63, 2
  %v73 = vmul.f32 %v68, %v71
  %v74 = vadd.f32 %v65, %v73
  %v75 = vadd.f32 %v66, %v68
  %v76 = vadd.f32 %v75, %v71
  %v77 = vrot.slane %v61, 4
  %v79 = vrot.slane %v63, 4
  %v81 = vmul.f32 %v77, %v79
  %v82 = vadd.f32 %v74, %v81
  %v83 = vadd.f32 %v76, %v77
  %v84 = vadd.f32 %v83, %v79
  %v85 = vrot.slane %v61, 6
  %v87 = vrot.slane %v63, 6
  %v89 = vmul.f32 %v85, %v87
  %v90 = vadd.f32 %v82, %v89
  %v91 = vadd.f32 %v84, %v85
  %v92 = vadd.f32 %v91, %v87
  %v93 = vmul.f32 %v62, %v64
  %v94 = vadd.f32 %v90, %v93
  %v95 = vadd.f32 %v92, %v62
  %v96 = vadd.f32 %v95, %v64
  %v98 = vrot.slane %v62, 2
  %v101 = vrot.slane %v64, 2
  %v103 = vmul.f32 %v98, %v101
  %v104 = vadd.f32 %v94, %v103
  %v105 = vadd.f32 %v96, %v98
  %v106 = vadd.f32 %v105, %v101
  %v107 = vrot.slane %v62, 4
  %v109 = vrot.slane %v64, 4
  %v111 = vmul.f32 %v107, %v109
  %v112 = vadd.f32 %v104, %v111
  %v113 = vadd.f32 %v106, %v107
  %v114 = vadd.f32 %v113, %v109
  %v115 = vrot.slane %v62, 6
  %v117 = vrot.slane %v64, 6
  %v119 = vmul.f32 %v115, %v117
  %v120 = vadd.f32 %v112, %v119
  %v121 = vadd.f32 %v114, %v115
  %v122 = vadd.f32 %v121, %v117
  %v123 = vld [vmem:[%s2] sm:$0x3]
  %v124 = vadd.f32 %v123, %v120
  %125 = vst [vmem:[%s2] sm:$0x3] %v124
  %s126 = scalar_lea.vmem %s2, 2
  %v127 = vld [vmem:[%s126] sm:$0x3]
  %v128 = vadd.f32 %v127, %v122
  %129 = vst [vmem:[%s126] sm:$0x3] %v128
  // Predicated region
  $region14: #{dice_loss.1} parent=0 // pred_check
    _
  $region15: #{dice_loss.1} parent=0 // pred_check_branch
    %131 = sbr.rel (0) target = $region17
  $region16: #{dice_loss.1} parent=0 // pred_region
    _
  $region17: #{dice_loss.1} parent=0 // pred_fallthru
    _
  // Predicated region
  $region18: #{dice_loss.1} parent=0 // pred_check
    _
  $region19: #{dice_loss.1} parent=0 // pred_check_branch
    %133 = sbr.rel (0) target = $region21
  $region20: #{dice_loss.1} parent=0 // pred_region
    _
  $region21: #{dice_loss.1} parent=0 // pred_fallthru
    _

</llo_original>
